<compile_context>
chip_gen: v7x
topology: tpu7x:2x2x1
jax: 0.10.0
libtpu: 0.0.40
codegen_flags: <defaults>
</compile_context>

<pallas_src>
import functools

import jax
import jax.numpy as jnp
from jax import lax
from jax.experimental import pallas as pl
from jax.experimental.pallas import tpu as pltpu

LAMBDA = 0.5
EPS = 1e-12


def _cdiv(a, b):
    return (a + b - 1) // b


def _round_up(x, m):
    return ((x + m - 1) // m) * m


def _round_down(x, m):
    return max(m, (x // m) * m)


def _vmem_capacity_bytes():
    # Trace-time hardware query; fall back to the most conservative value
    # (v7x per-TensorCore VMEM) if the query is unavailable.
    try:
        return int(pltpu.get_tpu_info().vmem_capacity_bytes)
    except Exception:
        return 64 << 20


def _ncl_kernel(student_ref, teacher_ref, targets_ref, out_ref, *,
                batch_size, rows_per_chunk):
    """One batch tile: stream RS-row compute chunks, emit one scalar partial."""
    TB, C = student_ref.shape
    RS = rows_per_chunk
    n_chunks = TB // RS

    row0 = pl.program_id(0) * TB
    rows_left = batch_size - row0          # valid rows in this tile (may exceed TB)

    # Loop-invariant iotas hoisted out of the chunk loop (JAX does not CSE
    # broadcast_in_dim; re-emitting them per chunk wastes VPU slots).
    cls_idx = lax.broadcasted_iota(jnp.int32, (RS, C), 1)
    row_idx = lax.broadcasted_iota(jnp.int32, (RS, 1), 0)

    def chunk(ci, acc):
        r0 = pl.multiple_of(ci * RS, RS)
        s = student_ref[pl.ds(r0, RS), :].astype(jnp.float32)    # [RS, C]
        t = teacher_ref[pl.ds(r0, RS), :].astype(jnp.float32)    # [RS, C]
        tgt = targets_ref[pl.ds(r0, RS), :]                      # [RS, 1] int32

        # Numerically stable log_softmax over the class (lane) axis.
        s_sh = s - jnp.max(s, axis=1, keepdims=True)
        s_ls = s_sh - jnp.log(jnp.sum(jnp.exp(s_sh), axis=1, keepdims=True))
        t_sh = t - jnp.max(t, axis=1, keepdims=True)
        t_ls = t_sh - jnp.log(jnp.sum(jnp.exp(t_sh), axis=1, keepdims=True))

        # term1 + term2 = ((1-λ)·F_g + λ·F_k - y) / (F_g·(1-F_g) + 1e-12).
        # Fold the one-hot y into a select on the numerator (no f32 one-hot buf).
        num = (1.0 - LAMBDA) * s_ls + LAMBDA * t_ls
        num = jnp.where(cls_idx == tgt, num - 1.0, num)
        denom = s_ls * (1.0 - s_ls) + EPS
        # EUP reciprocal + multiply instead of a full VPU divide.  approx=False
        # keeps the Newton refinement: denom can approach ~1e-12, so the fast
        # approximate path is not safe against the 1e-5 tolerance.
        fused = num * pl.reciprocal(denom, approx=False)

        # Reduce the class axis first (XLU slot), then mask only the [RS,1] row
        # sums: padded-row masking is per row (~3 VPU ops / C elements), not per
        # element, and uses a select so NaN/Inf from garbage padded rows never
        # leaks into the accumulator.
        row_sums = jnp.sum(fused, axis=1, keepdims=True)
        valid = row_idx < (rows_left - ci * RS)
        row_sums = jnp.where(valid, row_sums, 0.0)
        return acc + jnp.sum(row_sums, keepdims=True)

    total = lax.fori_loop(0, n_chunks, chunk, jnp.zeros((1, 1), jnp.float32))

    # One lane-dense partial-sum block per grid step (value replicated across
    # the (1, 8, 128) block; the wrapper reads [:, 0, 0]).
    out_ref[...] = jnp.full(out_ref.shape, total[0, 0], dtype=jnp.float32)


def ncl_loss(student_outputs, teacher_outputs, targets, *, tile_b=4096):
    """student/teacher: [B, C] float logits (any float dtype); targets: [B] ints."""
    B, C = student_outputs.shape
    targets_2d = targets.reshape(B, 1).astype(jnp.int32)

    itemsize = jnp.dtype(student_outputs.dtype).itemsize
    # Sublane packing of the input dtype: f32 -> 8, bf16 -> 16, int8/fp8 -> 32.
    pack = {4: 8, 2: 16, 1: 32}.get(itemsize, 8)

    # Inner compute-chunk rows: keep the ~8-10 live [RS, C] f32 temporaries
    # around 0.5 MiB total, independent of the (much larger) DMA tile.
    rs = _round_down(min(512, max(pack, (64 * 1024) // max(1, 4 * C))), pack)

    # Bytes streamed per batch row per pipeline buffer: student + teacher logits
    # plus the lane-padded (x128) int32 targets column.
    bytes_per_row = 2 * C * itemsize + 128 * 4

    vmem_cap = _vmem_capacity_bytes()
    big_vmem = vmem_cap >= (100 << 20)          # v5e/v6e: 128 MiB; v7x: 64 MiB
    # Total allowance for the double-buffered input streams.
    stream_budget = (32 << 20) if big_vmem else (16 << 20)

    tb = min(
        _round_down(stream_budget // (2 * bytes_per_row), pack),   # /2: double-buffered
        _round_up(B, pack),
        _round_up(max(pack, int(tile_b)), pack),
    )
    tb = max(pack, tb)
    if tb < rs:
        rs = _round_down(tb, pack)
    TB = _round_up(tb, rs)                      # DMA tile rows, multiple of rs
    num_tiles = _cdiv(B, TB)

    # v7x has 2 TensorCores; give the "parallel" batch axis >= 2 grid steps when
    # the batch is big enough to amortize the ~0.35 us per-step overhead.
    if num_tiles == 1 and B >= 1024:
        TB = max(rs, _round_up(_cdiv(B, 2), rs))
        num_tiles = _cdiv(B, TB)

    # Scoped-VMEM budget from the actual buffers (double-buffered input streams
    # + chunk temporaries + margin), capped well below physical VMEM per chip.
    inputs_bytes = 2 * (2 * TB * C * itemsize + TB * 128 * 4)
    interm_bytes = 10 * rs * C * 4
    vmem_ceiling = (100 << 20) if big_vmem else (44 << 20)
    vmem_bytes = int(min(vmem_ceiling,
                         max(8 << 20, inputs_bytes + interm_bytes + (4 << 20))))

    kernel = functools.partial(_ncl_kernel, batch_size=B, rows_per_chunk=rs)

    cost = pl.CostEstimate(
        flops=int(22 * B * C),
        transcendentals=int(3 * B * C),
        bytes_accessed=int(2 * B * C * itemsize + B * 4 + num_tiles * 8 * 128 * 4),
    )

    partials = pl.pallas_call(
        kernel,
        out_shape=jax.ShapeDtypeStruct((num_tiles, 8, 128), jnp.float32),
        grid=(num_tiles,),
        in_specs=[
            pl.BlockSpec((TB, C), lambda i: (i, 0)),   # student logits tile
            pl.BlockSpec((TB, C), lambda i: (i, 0)),   # teacher logits tile
            pl.BlockSpec((TB, 1), lambda i: (i, 0)),   # targets column tile
        ],
        out_specs=pl.BlockSpec((1, 8, 128), lambda i: (i, 0, 0)),
        compiler_params=pltpu.CompilerParams(
            dimension_semantics=("parallel",),
            vmem_limit_bytes=vmem_bytes,
        ),
        cost_estimate=cost,
    )(student_outputs, teacher_outputs, targets_2d)

    return jnp.sum(partials[:, 0, 0]) / jnp.float32(B)


def _reference(student_outputs, teacher_outputs, targets):
    s_ls = jax.nn.log_softmax(student_outputs.astype(jnp.float32), axis=1)
    t_ls = jax.nn.log_softmax(teacher_outputs.astype(jnp.float32), axis=1)
    B, C = s_ls.shape
    y = jax.nn.one_hot(targets, C, dtype=jnp.float32)
    denom = s_ls * (1.0 - s_ls) + EPS
    term1 = (1.0 - LAMBDA) * (s_ls - y) / denom
    term2 = LAMBDA * (t_ls - y) / denom
    return jnp.sum(term1 + term2) / B


if __name__ == "__main__":
    key = jax.random.PRNGKey(0)
    keys = jax.random.split(key, 9)

    # 1) Single-tile case consistent with the module: batch=8, num_classes=16.
    B, C = 8, 16
    student = jax.random.normal(keys[0], (B, C), dtype=jnp.float32)
    teacher = jax.random.normal(keys[1], (B, C), dtype=jnp.float32)
    targets = jax.random.randint(keys[2], (B,), 0, C, dtype=jnp.int32)
    loss = ncl_loss(student, teacher, targets)
    jax.block_until_ready(loss)
    ref = _reference(student, teacher, targets)
    assert jnp.allclose(loss, ref, rtol=1e-5, atol=1e-5), (loss, ref)

    # 2) Multi-tile grid with a remainder tile (B=20, TB=8): padded-row masking.
    B2, C2 = 20, 16
    student2 = jax.random.normal(keys[3], (B2, C2), dtype=jnp.float32)
    teacher2 = jax.random.normal(keys[4], (B2, C2), dtype=jnp.float32)
    targets2 = jax.random.randint(keys[5], (B2,), 0, C2, dtype=jnp.int32)
    loss2 = ncl_loss(student2, teacher2, targets2, tile_b=8)
    jax.block_until_ready(loss2)
    ref2 = _reference(student2, teacher2, targets2)
    assert jnp.allclose(loss2, ref2, rtol=1e-5, atol=1e-5), (loss2, ref2)

    # 3) Multi-tile + multi-chunk (TB=32, RS=16, last tile has a fully padded
    #    chunk) to exercise the inner compute-chunk loop.
    B3, C3 = 40, 1024
    student3 = jax.random.normal(keys[6], (B3, C3), dtype=jnp.float32)
    teacher3 = jax.random.normal(keys[7], (B3, C3), dtype=jnp.float32)
    targets3 = jax.random.randint(keys[8], (B3,), 0, C3, dtype=jnp.int32)
    loss3 = ncl_loss(student3, teacher3, targets3, tile_b=32)
    jax.block_until_ready(loss3)
    ref3 = _reference(student3, teacher3, targets3)
    assert jnp.allclose(loss3, ref3, rtol=1e-4, atol=1e-4), (loss3, ref3)

    print("KERNEL_OK")
</pallas_src>

<mosaic_0001>
module attributes {stable_mosaic.version = 11 : i64} {
  func.func @_ncl_kernel(%arg0: i32, %arg1: memref<8x16xf32, #tpu.memory_space<vmem>>, %arg2: memref<8x16xf32, #tpu.memory_space<vmem>>, %arg3: memref<8x1xi32, #tpu.memory_space<vmem>>, %arg4: memref<1x8x128xf32, #tpu.memory_space<vmem>>) attributes {dimension_semantics = [#tpu.dimension_semantics<parallel>], iteration_bounds = array<i64: 1>, scalar_prefetch = 0 : i64, scratch_operands = 0 : i64, tpu.core_type = #tpu.core_type<tc>, window_params = [{transform_indices = @transform_0, window_bounds = array<i64: 8, 16>}, {transform_indices = @transform_1, window_bounds = array<i64: 8, 16>}, {transform_indices = @transform_2, window_bounds = array<i64: 8, 1>}, {transform_indices = @transform_3, window_bounds = array<i64: 1, 8, 128>}]} {
    %c8_i32 = arith.constant 8 : i32
    %0 = arith.muli %arg0, %c8_i32 : i32
    %c8_i32_0 = arith.constant 8 : i32
    %1 = arith.subi %c8_i32_0, %0 : i32
    %2 = tpu.iota {dimensions = array<i32: 1>} : vector<8x16xi32>
    %3 = tpu.iota {dimensions = array<i32: 0>} : vector<8x1xi32>
    %cst = arith.constant 0.000000e+00 : f32
    %4 = vector.broadcast %cst : f32 to vector<1x1xf32>
    %c0_i32 = arith.constant 0 : i32
    %c8_i32_1 = arith.constant 8 : i32
    %5 = arith.muli %c0_i32, %c8_i32_1 : i32
    %6 = tpu.assume_multiple %5, 8 : i32
    %7 = arith.index_cast %6 : i32 to index
    %c0 = arith.constant 0 : index
    %8 = vector.load %arg1[%7, %c0] : memref<8x16xf32, #tpu.memory_space<vmem>>, vector<8x16xf32>
    %9 = arith.index_cast %6 : i32 to index
    %c0_2 = arith.constant 0 : index
    %10 = vector.load %arg2[%9, %c0_2] : memref<8x16xf32, #tpu.memory_space<vmem>>, vector<8x16xf32>
    %11 = arith.index_cast %6 : i32 to index
    %c0_3 = arith.constant 0 : index
    %12 = vector.load %arg3[%11, %c0_3] : memref<8x1xi32, #tpu.memory_space<vmem>>, vector<8x1xi32>
    %cst_4 = arith.constant dense<0xFF800000> : vector<8xf32>
    %13 = vector.multi_reduction <maximumf>, %8, %cst_4 [1] : vector<8x16xf32> to vector<8xf32>
    %14 = vector.shape_cast %13 : vector<8xf32> to vector<8x1xf32>
    %15 = vector.broadcast %14 : vector<8x1xf32> to vector<8x16xf32>
    %16 = arith.subf %8, %15 : vector<8x16xf32>
    %17 = math.exp %16 : vector<8x16xf32>
    %cst_5 = arith.constant dense<0.000000e+00> : vector<8xf32>
    %18 = vector.multi_reduction <add>, %17, %cst_5 [1] : vector<8x16xf32> to vector<8xf32>
    %19 = vector.shape_cast %18 : vector<8xf32> to vector<8x1xf32>
    %20 = math.log %19 : vector<8x1xf32>
    %21 = vector.broadcast %20 : vector<8x1xf32> to vector<8x16xf32>
    %22 = arith.subf %16, %21 : vector<8x16xf32>
    %cst_6 = arith.constant dense<0xFF800000> : vector<8xf32>
    %23 = vector.multi_reduction <maximumf>, %10, %cst_6 [1] : vector<8x16xf32> to vector<8xf32>
    %24 = vector.shape_cast %23 : vector<8xf32> to vector<8x1xf32>
    %25 = vector.broadcast %24 : vector<8x1xf32> to vector<8x16xf32>
    %26 = arith.subf %10, %25 : vector<8x16xf32>
    %27 = math.exp %26 : vector<8x16xf32>
    %cst_7 = arith.constant dense<0.000000e+00> : vector<8xf32>
    %28 = vector.multi_reduction <add>, %27, %cst_7 [1] : vector<8x16xf32> to vector<8xf32>
    %29 = vector.shape_cast %28 : vector<8xf32> to vector<8x1xf32>
    %30 = math.log %29 : vector<8x1xf32>
    %31 = vector.broadcast %30 : vector<8x1xf32> to vector<8x16xf32>
    %32 = arith.subf %26, %31 : vector<8x16xf32>
    %cst_8 = arith.constant 5.000000e-01 : f32
    %33 = vector.broadcast %cst_8 : f32 to vector<8x16xf32>
    %34 = arith.mulf %33, %22 : vector<8x16xf32>
    %cst_9 = arith.constant 5.000000e-01 : f32
    %35 = vector.broadcast %cst_9 : f32 to vector<8x16xf32>
    %36 = arith.mulf %35, %32 : vector<8x16xf32>
    %37 = arith.addf %34, %36 : vector<8x16xf32>
    %38 = vector.broadcast %12 : vector<8x1xi32> to vector<8x16xi32>
    %39 = arith.cmpi eq, %2, %38 : vector<8x16xi32>
    %cst_10 = arith.constant 1.000000e+00 : f32
    %40 = vector.broadcast %cst_10 : f32 to vector<8x16xf32>
    %41 = arith.subf %37, %40 : vector<8x16xf32>
    %42 = arith.select %39, %41, %37 : vector<8x16xi1>, vector<8x16xf32>
    %cst_11 = arith.constant 1.000000e+00 : f32
    %43 = vector.broadcast %cst_11 : f32 to vector<8x16xf32>
    %44 = arith.subf %43, %22 : vector<8x16xf32>
    %45 = arith.mulf %22, %44 : vector<8x16xf32>
    %cst_12 = arith.constant 9.99999996E-13 : f32
    %46 = vector.broadcast %cst_12 : f32 to vector<8x16xf32>
    %47 = arith.addf %45, %46 : vector<8x16xf32>
    %48 = tpu.reciprocal %47 : vector<8x16xf32> -> vector<8x16xf32>
    %49 = arith.mulf %42, %48 : vector<8x16xf32>
    %cst_13 = arith.constant dense<0.000000e+00> : vector<8xf32>
    %50 = vector.multi_reduction <add>, %49, %cst_13 [1] : vector<8x16xf32> to vector<8xf32>
    %51 = vector.shape_cast %50 : vector<8xf32> to vector<8x1xf32>
    %c8_i32_14 = arith.constant 8 : i32
    %52 = arith.muli %c0_i32, %c8_i32_14 : i32
    %53 = arith.subi %1, %52 : i32
    %54 = vector.broadcast %53 : i32 to vector<8x1xi32>
    %55 = arith.cmpi slt, %3, %54 : vector<8x1xi32>
    %cst_15 = arith.constant 0.000000e+00 : f32
    %56 = vector.broadcast %cst_15 : f32 to vector<8x1xf32>
    %57 = arith.select %55, %51, %56 : vector<8x1xi1>, vector<8x1xf32>
    %58 = vector.shape_cast %57 : vector<8x1xf32> to vector<1x8x1xf32>
    %cst_16 = arith.constant dense<0.000000e+00> : vector<1xf32>
    %59 = vector.multi_reduction <add>, %58, %cst_16 [1, 2] : vector<1x8x1xf32> to vector<1xf32>
    %60 = vector.shape_cast %59 : vector<1xf32> to vector<1x1x1xf32>
    %61 = vector.extract %60[0, 0, 0] : f32 from vector<1x1x1xf32>
    %62 = vector.broadcast %61 : f32 to vector<1x1xf32>
    %63 = arith.addf %4, %62 : vector<1x1xf32>
    %c1_i32 = arith.constant 1 : i32
    %64 = vector.extract %63[0, 0] : f32 from vector<1x1xf32>
    %65 = vector.broadcast %64 : f32 to vector<1x8x128xf32>
    %c0_17 = arith.constant 0 : index
    %c0_18 = arith.constant 0 : index
    %c0_19 = arith.constant 0 : index
    %66 = vector.load %arg4[%c0_17, %c0_18, %c0_19] : memref<1x8x128xf32, #tpu.memory_space<vmem>>, vector<1x8x128xf32>
    tpu.vector_store %arg4[%c0_17, %c0_18, %c0_19], %65 {strides = array<i32>} : memref<1x8x128xf32, #tpu.memory_space<vmem>>, vector<1x8x128xf32>,
    return
  }
  func.func @transform_0(%arg0: i32) -> (i32, i32) {
    %c0_i32 = arith.constant 0 : i32
    %c0_i32_0 = arith.constant 0 : i32
    return %arg0, %c0_i32 : i32, i32
  }
  func.func @transform_1(%arg0: i32) -> (i32, i32) {
    %c0_i32 = arith.constant 0 : i32
    %c0_i32_0 = arith.constant 0 : i32
    return %arg0, %c0_i32 : i32, i32
  }
  func.func @transform_2(%arg0: i32) -> (i32, i32) {
    %c0_i32 = arith.constant 0 : i32
    %c0_i32_0 = arith.constant 0 : i32
    return %arg0, %c0_i32 : i32, i32
  }
  func.func @transform_3(%arg0: i32) -> (i32, i32, i32) {
    %c0_i32 = arith.constant 0 : i32
    %c0_i32_0 = arith.constant 0 : i32
    %c0_i32_1 = arith.constant 0 : i32
    return %arg0, %c0_i32, %c0_i32_0 : i32, i32, i32
  }
}

</mosaic_0001>

<llo_original>
// kernel: tpu_custom_call.1
$region0: #{tpu_custom_call.1}
  #allocation0 [shape = 'u32[]', space=smem, size = 0x4, offset = 0x4, fixed_abs, tag = 'smem constant byte address 0x4 - core index']
  #allocation1 [shape = 'u32[144,128]{1,0:T(1,128)}', space=vmem, size = 0x12000, scoped, tag = 'internal scratch']
  %s0 = inlined_call_operand.vmem [shape: f32[8,16], index: 0, kind: input, shape index: {}]
  %s1 = inlined_call_operand.hbm [shape: f32[8,16], index: 1, kind: input, shape index: {}]
  %s2 = inlined_call_operand.vmem [shape: s32[8,1], index: 2, kind: input, shape index: {}]
  %s3 = inlined_call_operand.hbm [shape: f32[1,8,128], index: 3, kind: output, shape index: {}]
  %s4 = sld [smem:[#allocation0]]
  $region26: #{tpu_custom_call.1} parent=0
    _
  %s6 = ssub.s32 1, %s4
  %s7 = scalar_select 0, %s6, %s4
  $region1: #{tpu_custom_call.1} parent=0
    #allocation2 [shape = 'u8[4096]{0}', space=vmem, size = 0x1000, scoped, tag = 'input window, operand 1, single buffered']
    #allocation3 [shape = 's32[1]{0}', space=sflag, size = 0x4, scoped, tag = 'scoped memory for tpu_custom_call.1']
    #allocation4 [shape = 's32[1]{0}', space=sflag, size = 0x4, scoped, tag = 'scoped memory for tpu_custom_call.1']
    #allocation5 [shape = 'u8[4096]{0}', space=vmem, size = 0x1000, scoped, tag = 'output window, operand 0, single buffered']
    %8 = vsyncpa [#allocation3], 0
    %9 = vsyncpa [#allocation4], 0
    // Predicated region
    $region2: #{tpu_custom_call.1} parent=1 // pred_check
      _
    $region3: #{tpu_custom_call.1} parent=1 // pred_check_branch
      %11 = sbr.rel (0) target = $region5
    $region4: #{tpu_custom_call.1} parent=1 // pred_region
      _
    $region5: #{tpu_custom_call.1} parent=1 // pred_fallthru
      _
    // Predicated region
    $region6: #{tpu_custom_call.1} parent=1 // pred_check
      _
    $region7: #{tpu_custom_call.1} parent=1 // pred_check_branch
      %13 = sbr.rel (0) target = $region9
    $region8: #{tpu_custom_call.1} parent=1 // pred_region
      %s15 = ssub.s32 128, 128
      %16 = vsyncadd [#allocation3], %s15
      %s18 = sshll.u32 [#allocation2], 4
      %s19 = int_to_ptr.vmem [resolvable:$true] %s18
      %21 = dma.hbm_to_vmem [thread:$0]  %s1, 128, %s19, [#allocation3]
    $region9: #{tpu_custom_call.1} parent=1 // pred_fallthru
      _
    // Predicated region
    $region10: #{tpu_custom_call.1} parent=1 // pred_check
      _
    $region11: #{tpu_custom_call.1} parent=1 // pred_check_branch
      %23 = sbr.rel (0) target = $region13
    $region12: #{tpu_custom_call.1} parent=1 // pred_region
      _
    $region13: #{tpu_custom_call.1} parent=1 // pred_fallthru
      _
    // Predicated region
    $region14: #{tpu_custom_call.1} parent=1 // pred_check
      _
    $region15: #{tpu_custom_call.1} parent=1 // pred_check_branch
      %25 = sbr.rel (0) target = $region17
    $region16: #{tpu_custom_call.1} parent=1 // pred_region
      %26 = dma.done [#allocation3], 128
    $region17: #{tpu_custom_call.1} parent=1 // pred_fallthru
      _
    %s27 = smul.u32 0, 8
    %s28 = ssub.s32 8, %s27
    %v29 = vlaneseq
    %v30 = vand.u32 %v29, 127
    %v31 = vlaneseq
    %v32 = vshrl.u32 %v31, 7
    %v33 = vld [vmem:[%s0] sm:$0xff]
    %v34 = vld [vmem:[#allocation2] sm:$0xff]
    %v35 = vld [vmem:[%s2] sm:$0xff]
    %vm36 = vcmask 130048
    %v37 = vsel %vm36, %v33, -inf
    %38 = vmax.xlane.f32.xlu0 %v37
    %v39 = vpop.xlane.xlu0 %38
    %v40 = vsub.f32 %v33, %v39
    %v41 = vmul.f32 %v40, 1.442695
    %v42 = vpow.pop %v41
    %v43 = vsel %vm36, %v42, 0.0
    %44 = vadd.xlane.f32.xlu0 %v43
    %v45 = vpop.xlane.xlu0 %44
    %v46 = vlog2.pop %v45
    %v47 = vmul.f32 %v46, 0.6931472
    %v48 = vsub.f32 %v40, %v47
    %v49 = vsel %vm36, %v34, -inf
    %50 = vmax.xlane.f32.xlu0 %v49
    %v51 = vpop.xlane.xlu0 %50
    %v52 = vsub.f32 %v34, %v51
    %v53 = vmul.f32 %v52, 1.442695
    %v54 = vpow.pop %v53
    %v55 = vsel %vm36, %v54, 0.0
    %56 = vadd.xlane.f32.xlu0 %v55
    %v57 = vpop.xlane.xlu0 %56
    %v58 = vlog2.pop %v57
    %v59 = vmul.f32 %v58, 0.6931472
    %v60 = vsub.f32 %v52, %v59
    %v61 = vmul.f32 %v48, 0.5
    %v62 = vmul.f32 %v60, 0.5
    %v63 = vadd.f32 %v61, %v62
    %64 = vset.pattern.permute.xlu0 0
    %65 = vperm.xlu0 %64, %v35
    %v66 = vpop.permute.xlu0 %65
    %vm67 = vcmp.eq.s32.totalorder %v30, %v66
    %v68 = vsub.f32 %v63, 1.0
    %v69 = vsel %vm67, %v68, %v63
    %v70 = vsub.f32 1.0, %v48
    %v71 = vmul.f32 %v48, %v70
    %v72 = vadd.f32 %v71, 1e-12
    %v73 = vrcp.pop %v72
    %v74 = vmul.f32 %v69, %v73
    %v75 = vsel %vm36, %v74, 0.0
    %76 = vadd.xlane.f32.xlu0 %v75
    %v77 = vpop.xlane.xlu0 %76
    %v78 = vstv %s28
    %vm79 = vcmp.lt.s32.totalorder %v32, %v78
    %v80 = vsel %vm79, %v77, 0.0
    %vm81 = vcmask 7168
    %v82 = vsel %vm81, %v80, 0.0
    %83 = vadd.xlane.f32.xlu0 %v82
    %v84 = vpop.xlane.xlu0 %83
    %v85 = vrot.slane %v84, 4
    %v86 = vadd.f32 %v84, %v85
    %v87 = vrot.slane %v86, 2
    %v88 = vadd.f32 %v86, %v87
    %v89 = vrot.slane %v88, 1
    %v90 = vadd.f32 %v88, %v89
    %s91 = vtos %v90
    %v92 = vstv %s91
    %v93 = vadd.f32 %v92, 0.0
    %s94 = vtos %v93
    %v95 = vstv %s94
    %96 = vst [vmem:[#allocation5] sm:$0xff] %v95
    // Predicated region
    $region18: #{tpu_custom_call.1} parent=1 // pred_check
      _
    $region19: #{tpu_custom_call.1} parent=1 // pred_check_branch
      %98 = sbr.rel (0) target = $region21
    $region20: #{tpu_custom_call.1} parent=1 // pred_region
      %s100 = ssub.s32 128, 128
      %101 = vsyncadd [#allocation4], %s100
      %s103 = sshll.u32 [#allocation5], 4
      %s104 = int_to_ptr.vmem [resolvable:$true] %s103
      %106 = dma.vmem_to_hbm [thread:$0]  %s104, 128, %s3, [#allocation4]
    $region21: #{tpu_custom_call.1} parent=1 // pred_fallthru
      _
    // Predicated region
    $region22: #{tpu_custom_call.1} parent=1 // pred_check
      _
    $region23: #{tpu_custom_call.1} parent=1 // pred_check_branch
      %108 = sbr.rel (0) target = $region25
    $region24: #{tpu_custom_call.1} parent=1 // pred_region
      %109 = dma.done [#allocation4], 128
    $region25: #{tpu_custom_call.1} parent=1 // pred_fallthru
      _
    %110 = vsyncpa [#allocation3], 1
    %111 = vsyncpa [#allocation4], 1

</llo_original>
